<compile_context>
chip_gen: v6e
topology: v6e:2x2x1
jax: 0.10.0
libtpu: 0.0.40
codegen_flags: <defaults>
</compile_context>

<pallas_src>
import functools

import jax
import jax.numpy as jnp
from jax import lax
from jax.experimental import pallas as pl
from jax.experimental.pallas import tpu as pltpu


def _round_up(n: int, m: int) -> int:
    return ((n + m - 1) // m) * m


def linear_relu_kernel(x_ref, w_ref, b_ref, o_ref):
    # x_ref: (TM, F_in_p)      bf16  batch tile
    # w_ref: (F_out_p, F_in_p) bf16  full weight (torch Linear layout)
    # b_ref: (1, F_out_p)      f32   bias row
    # o_ref: (TM, F_out_p)           output tile
    # Contract last dim of x with last dim of W  ->  (TM, F_out_p), f32 acc.
    acc = lax.dot_general(
        x_ref[...], w_ref[...],
        dimension_numbers=(((1,), (1,)), ((), ())),
        preferred_element_type=jnp.float32,
    )
    acc = acc + b_ref[...]                      # broadcast (1, F_out_p)
    o_ref[...] = jnp.maximum(acc, 0.0).astype(o_ref.dtype)


@functools.partial(jax.jit, static_argnames=("compute_dtype",))
def dummy_structured_encoder(x, weight, bias, *, compute_dtype=jnp.bfloat16):
    """x: (B, F_in); weight: (F_out, F_in) [torch layout]; bias: (F_out,)."""
    B, F_in = x.shape
    F_out = weight.shape[0]

    # Lane-dense padded sizes (multiples of 128 on the last dims).
    F_in_p = _round_up(F_in, 128)
    F_out_p = _round_up(F_out, 128)

    # Batch tile: up to 256 rows per grid step (feeds the 256-row MXU pass on
    # v6e/v7x; also fine on v5e), rounded to the 8-row sublane granule.
    B8 = _round_up(B, 8)
    TM = min(256, B8)
    B_pad = _round_up(B8, TM)

    # Zero-pad and cast MXU operands to bf16 (f32 accumulation in-kernel).
    # In a real model, do the pad/cast once at parameter-load time.
    x_p = jnp.pad(x, ((0, B_pad - B), (0, F_in_p - F_in))).astype(compute_dtype)
    w_p = jnp.pad(weight, ((0, F_out_p - F_out), (0, F_in_p - F_in))).astype(compute_dtype)
    b_p = jnp.pad(bias, (0, F_out_p - F_out)).astype(jnp.float32).reshape(1, F_out_p)

    grid = (B_pad // TM,)

    out_padded = pl.pallas_call(
        linear_relu_kernel,
        out_shape=jax.ShapeDtypeStruct((B_pad, F_out_p), x.dtype),
        grid_spec=pl.GridSpec(
            grid=grid,
            in_specs=[
                pl.BlockSpec((TM, F_in_p), lambda i: (i, 0)),        # x tile
                pl.BlockSpec((F_out_p, F_in_p), lambda i: (0, 0)),   # weight (resident)
                pl.BlockSpec((1, F_out_p), lambda i: (0, 0)),        # bias
            ],
            out_specs=pl.BlockSpec((TM, F_out_p), lambda i: (i, 0)),
        ),
        compiler_params=pltpu.CompilerParams(
            # Batch tiles are independent: shard across TCs on v7x.
            dimension_semantics=("parallel",),
        ),
    )(x_p, w_p, b_p)

    return out_padded[:B, :F_out]


if __name__ == "__main__":
    # Small shapes consistent with the module: Linear(input_features=32 -> 64)
    batch, in_features, out_features = 8, 32, 64

    key = jax.random.PRNGKey(0)
    kx, kw, kb = jax.random.split(key, 3)

    x = jax.random.normal(kx, (batch, in_features), dtype=jnp.float32)
    # Deterministic parameter init (mimics torch Linear's uniform(-1/sqrt(fan_in), +))
    bound = 1.0 / jnp.sqrt(jnp.float32(in_features))
    weight = jax.random.uniform(kw, (out_features, in_features),
                                minval=-bound, maxval=bound, dtype=jnp.float32)
    bias = jax.random.uniform(kb, (out_features,),
                              minval=-bound, maxval=bound, dtype=jnp.float32)

    out = dummy_structured_encoder(x, weight, bias)
    out = jax.block_until_ready(out)

    # Pure-JAX f32 reference; tolerance loosened for bf16 MXU operands.
    ref = jnp.maximum(x @ weight.T + bias, 0.0)
    assert out.shape == (batch, out_features)
    assert jnp.allclose(out, ref, atol=2e-2, rtol=2e-2), (
        float(jnp.max(jnp.abs(out - ref))))

    print("KERNEL_OK")
</pallas_src>

<mosaic_0001>
module attributes {stable_mosaic.version = 11 : i64} {
  func.func @linear_relu_kernel(%arg0: i32, %arg1: memref<8x128xbf16, #tpu.memory_space<vmem>>, %arg2: memref<128x128xbf16, #tpu.memory_space<vmem>>, %arg3: memref<1x128xf32, #tpu.memory_space<vmem>>, %arg4: memref<8x128xf32, #tpu.memory_space<vmem>>) attributes {dimension_semantics = [#tpu.dimension_semantics<parallel>], iteration_bounds = array<i64: 1>, scalar_prefetch = 0 : i64, scratch_operands = 0 : i64, tpu.core_type = #tpu.core_type<tc>, window_params = [{transform_indices = @transform_0, window_bounds = array<i64: 8, 128>}, {pipeline_mode = #tpu.pipeline_mode<synchronous>, transform_indices = @transform_1, window_bounds = array<i64: 128, 128>}, {pipeline_mode = #tpu.pipeline_mode<synchronous>, transform_indices = @transform_2, window_bounds = array<i64: 1, 128>}, {transform_indices = @transform_3, window_bounds = array<i64: 8, 128>}]} {
    %c0 = arith.constant 0 : index
    %c0_0 = arith.constant 0 : index
    %0 = vector.load %arg1[%c0, %c0_0] : memref<8x128xbf16, #tpu.memory_space<vmem>>, vector<8x128xbf16>
    %c0_1 = arith.constant 0 : index
    %c0_2 = arith.constant 0 : index
    %1 = vector.load %arg2[%c0_1, %c0_2] : memref<128x128xbf16, #tpu.memory_space<vmem>>, vector<128x128xbf16>
    %cst = arith.constant dense<0.000000e+00> : vector<8x128xf32>
    %2 = tpu.matmul %0, %1, %cst {dimension_numbers = #tpu.dot_dimension_numbers<[1], [1], [0], [0], [0, 0, 1, 0], [], []>} : vector<8x128xbf16>, vector<128x128xbf16>, vector<8x128xf32> -> vector<8x128xf32>
    %c0_3 = arith.constant 0 : index
    %c0_4 = arith.constant 0 : index
    %3 = vector.load %arg3[%c0_3, %c0_4] : memref<1x128xf32, #tpu.memory_space<vmem>>, vector<1x128xf32>
    %4 = vector.broadcast %3 : vector<1x128xf32> to vector<8x128xf32>
    %5 = arith.addf %2, %4 : vector<8x128xf32>
    %cst_5 = arith.constant 0.000000e+00 : f32
    %6 = vector.broadcast %cst_5 : f32 to vector<8x128xf32>
    %7 = arith.maximumf %5, %6 : vector<8x128xf32>
    %c0_6 = arith.constant 0 : index
    %c0_7 = arith.constant 0 : index
    %8 = vector.load %arg4[%c0_6, %c0_7] : memref<8x128xf32, #tpu.memory_space<vmem>>, vector<8x128xf32>
    tpu.vector_store %arg4[%c0_6, %c0_7], %7 {strides = array<i32>} : memref<8x128xf32, #tpu.memory_space<vmem>>, vector<8x128xf32>,
    return
  }
  func.func @transform_0(%arg0: i32) -> (i32, i32) {
    %c0_i32 = arith.constant 0 : i32
    %c0_i32_0 = arith.constant 0 : i32
    return %arg0, %c0_i32 : i32, i32
  }
  func.func @transform_1(%arg0: i32) -> (i32, i32) {
    %c0_i32 = arith.constant 0 : i32
    %c0_i32_0 = arith.constant 0 : i32
    %c0_i32_1 = arith.constant 0 : i32
    return %c0_i32, %c0_i32_0 : i32, i32
  }
  func.func @transform_2(%arg0: i32) -> (i32, i32) {
    %c0_i32 = arith.constant 0 : i32
    %c0_i32_0 = arith.constant 0 : i32
    %c0_i32_1 = arith.constant 0 : i32
    return %c0_i32, %c0_i32_0 : i32, i32
  }
  func.func @transform_3(%arg0: i32) -> (i32, i32) {
    %c0_i32 = arith.constant 0 : i32
    %c0_i32_0 = arith.constant 0 : i32
    return %arg0, %c0_i32 : i32, i32
  }
}

</mosaic_0001>

<llo_original>
// kernel: dummy_structured_encoder.1
$region0: #{dummy_structured_encoder.1}
  #allocation0 [shape = 'u32[]', space=smem, size = 0x4, offset = 0x4, fixed_abs, tag = 'smem constant byte address 0x4 - core index']
  #allocation1 [shape = 'u32[144,128]{1,0:T(1,128)}', space=vmem, size = 0x12000, scoped, tag = 'internal scratch']
  %s0 = inlined_call_operand.vmem [shape: bf16[8,128], index: 0, kind: input, shape index: {}]
  %s1 = inlined_call_operand.vmem [shape: bf16[128,128], index: 1, kind: input, shape index: {}]
  %s2 = inlined_call_operand.vmem [shape: f32[1,128], index: 2, kind: input, shape index: {}]
  %s3 = inlined_call_operand.hbm [shape: f32[8,128], index: 3, kind: output, shape index: {}]
  %s4 = sld [smem:[#allocation0]]
  $region22: #{dummy_structured_encoder.1} parent=0
    _
  %s6 = ssub.s32 1, %s4
  %s7 = scalar_select 0, %s6, %s4
  $region1: #{dummy_structured_encoder.1} parent=0
    #allocation2 [shape = 'u8[4096]{0}', space=vmem, size = 0x1000, scoped, tag = 'output window, operand 0, single buffered']
    #allocation3 [shape = 's32[1]{0}', space=sflag, size = 0x4, scoped, tag = 'scoped memory for dummy_structured_encoder.1']
    %8 = vsyncpa [#allocation3], 0
    // Predicated region
    $region2: #{dummy_structured_encoder.1} parent=1 // pred_check
      _
    $region3: #{dummy_structured_encoder.1} parent=1 // pred_check_branch
      %10 = sbr.rel (0) target = $region5
    $region4: #{dummy_structured_encoder.1} parent=1 // pred_region
      _
    $region5: #{dummy_structured_encoder.1} parent=1 // pred_fallthru
      _
    // Predicated region
    $region6: #{dummy_structured_encoder.1} parent=1 // pred_check
      _
    $region7: #{dummy_structured_encoder.1} parent=1 // pred_check_branch
      %12 = sbr.rel (0) target = $region9
    $region8: #{dummy_structured_encoder.1} parent=1 // pred_region
      _
    $region9: #{dummy_structured_encoder.1} parent=1 // pred_fallthru
      _
    // Predicated region
    $region10: #{dummy_structured_encoder.1} parent=1 // pred_check
      _
    $region11: #{dummy_structured_encoder.1} parent=1 // pred_check_branch
      %14 = sbr.rel (0) target = $region13
    $region12: #{dummy_structured_encoder.1} parent=1 // pred_region
      _
    $region13: #{dummy_structured_encoder.1} parent=1 // pred_fallthru
      _
    %v16 = vld [vmem:[%s0] sm:$0xf]
    %v17 = vld [vmem:[%s1] sm:$0xf]
    %v18 = vld [vmem:[%s1 + $0x4] sm:$0xf]
    %v19 = vld [vmem:[%s1 + $0x8] sm:$0xf]
    %v20 = vld [vmem:[%s1 + $0xc] sm:$0xf]
    %v21 = vld [vmem:[%s1 + $0x10] sm:$0xf]
    %v22 = vld [vmem:[%s1 + $0x14] sm:$0xf]
    %v23 = vld [vmem:[%s1 + $0x18] sm:$0xf]
    %v24 = vld [vmem:[%s1 + $0x1c] sm:$0xf]
    %v25 = vld [vmem:[%s1 + $0x20] sm:$0xf]
    %v26 = vld [vmem:[%s1 + $0x24] sm:$0xf]
    %v27 = vld [vmem:[%s1 + $0x28] sm:$0xf]
    %v28 = vld [vmem:[%s1 + $0x2c] sm:$0xf]
    %v29 = vld [vmem:[%s1 + $0x30] sm:$0xf]
    %v30 = vld [vmem:[%s1 + $0x34] sm:$0xf]
    %v31 = vld [vmem:[%s1 + $0x38] sm:$0xf]
    %v32 = vld [vmem:[%s1 + $0x3c] sm:$0xf]
    %v33 = vld [vmem:[%s2] sm:$0x1]
    %v35 = vlaneseq
    %v36 = vshrl.u32 %v35, 7
    %v37 = vsub.s32 0, %v36
    %v38 = vrot.slane %v33, %v37
    %v56 = vunpack.c.l.b16 %v17
    %v57 = vunpack.c.l.b16 %v18
    %v58 = vunpack.c.l.b16 %v19
    %v59 = vunpack.c.l.b16 %v20
    %v60 = vunpack.c.l.b16 %v21
    %v61 = vunpack.c.l.b16 %v22
    %v62 = vunpack.c.l.b16 %v23
    %v63 = vunpack.c.l.b16 %v24
    %v64 = vunpack.c.l.b16 %v25
    %v65 = vunpack.c.l.b16 %v26
    %v66 = vunpack.c.l.b16 %v27
    %v67 = vunpack.c.l.b16 %v28
    %v68 = vunpack.c.l.b16 %v29
    %v69 = vunpack.c.l.b16 %v30
    %v70 = vunpack.c.l.b16 %v31
    %v71 = vunpack.c.l.b16 %v32
    %v72 = vpack.c.b16 %v57, %v56
    %v73 = vpack.c.b16 %v59, %v58
    %v74 = vpack.c.b16 %v61, %v60
    %v75 = vpack.c.b16 %v63, %v62
    %v76 = vpack.c.b16 %v65, %v64
    %v77 = vpack.c.b16 %v67, %v66
    %v78 = vpack.c.b16 %v69, %v68
    %v79 = vpack.c.b16 %v71, %v70
    %88 = vmatprep.subr.bf16.mxu0 0
    %89 = vmatpush1.bf16.xpose.msra.mxu0 %v79
    %90 = vmatprep.subr.bf16.mxu0 0
    %91 = vmatpush1.bf16.xpose.msra.mxu0 %v78
    %92 = vmatprep.subr.bf16.mxu0 0
    %93 = vmatpush1.bf16.xpose.msra.mxu0 %v77
    %94 = vmatprep.subr.bf16.mxu0 0
    %95 = vmatpush1.bf16.xpose.msra.mxu0 %v76
    %96 = vmatprep.subr.bf16.mxu0 0
    %97 = vmatpush1.bf16.xpose.msra.mxu0 %v75
    %98 = vmatprep.subr.bf16.mxu0 0
    %99 = vmatpush1.bf16.xpose.msra.mxu0 %v74
    %100 = vmatprep.subr.bf16.mxu0 0
    %101 = vmatpush1.bf16.xpose.msra.mxu0 %v73
    %102 = vmatprep.subr.bf16.mxu0 0
    %103 = vmatpush1.bf16.xpose.msra.mxu0 %v72
    %104 = vmatprep.subr.bf16.mxu0 0
    %105 = vmatpush2.bf16.xpose.msra.mxu0 0
    %106 = vmatprep.subr.bf16.mxu0 0
    %107 = vmatpush2.bf16.xpose.msra.mxu0 0
    %108 = vmatprep.subr.bf16.mxu0 0
    %109 = vmatpush2.bf16.xpose.msra.mxu0 0
    %110 = vmatprep.subr.bf16.mxu0 0
    %111 = vmatpush2.bf16.xpose.msra.mxu0 0
    %112 = vmatprep.subr.bf16.mxu0 0
    %113 = vmatpush2.bf16.xpose.msra.mxu0 0
    %114 = vmatprep.subr.bf16.mxu0 0
    %115 = vmatpush2.bf16.xpose.msra.mxu0 0
    %116 = vmatprep.subr.bf16.mxu0 0
    %117 = vmatpush2.bf16.xpose.msra.mxu0 0
    %118 = vmatprep.subr.bf16.mxu0 0
    %119 = vmatpush2.bf16.xpose.msra.mxu0 0
    %120 = vmatprep.mubr.bf16.mxu0 0
    %121 = vmatmul.mubr.bf16.gmra.mxu0 %v16
    %v122 = vpop.f32.mrf.mxu0
    %v123 = vadd.f32 %v38, %v122
    %v124 = vpop.f32.mrf.mxu0
    %v125 = vpop.f32.mrf.mxu0
    %v126 = vpop.f32.mrf.mxu0
    %127 = vdwg.mxu0
    %v128 = vmax.f32 %v123, 0.0
    %129 = vst [vmem:[#allocation2] sm:$0xff] %v128
    // Predicated region
    $region14: #{dummy_structured_encoder.1} parent=1 // pred_check
      _
    $region15: #{dummy_structured_encoder.1} parent=1 // pred_check_branch
      %131 = sbr.rel (0) target = $region17
    $region16: #{dummy_structured_encoder.1} parent=1 // pred_region
      %s133 = ssub.s32 128, 128
      %134 = vsyncadd [#allocation3], %s133
      %s136 = sshll.u32 [#allocation2], 4
      %s137 = int_to_ptr.vmem [resolvable:$true] %s136
      %139 = dma.vmem_to_hbm [thread:$0]  %s137, 128, %s3, [#allocation3]
    $region17: #{dummy_structured_encoder.1} parent=1 // pred_fallthru
      _
    // Predicated region
    $region18: #{dummy_structured_encoder.1} parent=1 // pred_check
      _
    $region19: #{dummy_structured_encoder.1} parent=1 // pred_check_branch
      %141 = sbr.rel (0) target = $region21
    $region20: #{dummy_structured_encoder.1} parent=1 // pred_region
      %142 = dma.done [#allocation3], 128
    $region21: #{dummy_structured_encoder.1} parent=1 // pred_fallthru
      _
    %143 = vsyncpa [#allocation3], 1

</llo_original>
